<compile_context>
chip_gen: v7x
topology: tpu7x:2x2x1
jax: 0.10.0
libtpu: 0.0.40
codegen_flags: <defaults>
</compile_context>

<pallas_src>
import functools

import numpy as np
import jax
import jax.numpy as jnp
from jax.experimental import pallas as pl
from jax.experimental.pallas import tpu as pltpu

ENDTIME = 3.0
# ODEBlock integrates over [0, endtime] with method='euler': one step of size
# endtime.  The kernel hard-codes exactly one Euler step, so assert the grid
# really is two points (review correctness concern).
INTEGRATION_TIME = (0.0, ENDTIME)
DT = ENDTIME


def _kuramoto_euler_kernel(state_ref, params_ref, out_ref):
    """One fused Euler step for a lane-tile of states.

    state_ref : (12, TB) f32, batch on lanes, features on sublanes:
                rows 0:4 = x1 (angles), 4:8 = x2 (velocities), 8:12 = xi.
    params_ref: (40, 24) f32 packed slab (all views lane-offset 0 and at
                8-aligned sublane offsets; padded entries are zero):
                  [ 0:24, 0:24] W1 = blockdiag(adj^T x4, DT*AG, K)
                  [24:32, 0: 4] W2 = [ -1.25*DT*AG^T K^T ; DT*F K^T ]
                  [32:36, 0: 1] b
    out_ref   : (12, TB) f32 (aliased onto the state buffer).
    """
    st = state_ref[...]
    x1 = st[0:4, :]
    x2 = st[4:8, :]
    xi = st[8:12, :]

    c = jnp.cos(x1)          # cos/sin computed once per node and reused (EUP)
    s = jnp.sin(x1)

    w1 = params_ref[0:24, :]          # (24, 24)
    w2 = params_ref[24:32, 0:4]       # (8, 4)
    b = params_ref[32:36, 0:1]        # (4, 1) -> broadcasts along lanes

    # --- MXU pass 1: six independent 4x4 left-matvecs fused into one
    #     (24,24) @ (24,TB) product, N = TB lane-dense columns.
    lhs = jnp.concatenate([c, s, c * x2, s * x2, x2, xi], axis=0)    # (24, TB)
    p1 = jnp.dot(w1, lhs, preferred_element_type=jnp.float32)        # (24, TB)

    ca = p1[0:4, :]       # adj^T cos(x1)
    sa = p1[4:8, :]       # adj^T sin(x1)
    cxa = p1[8:12, :]     # adj^T (cos(x1)*x2)
    sxa = p1[12:16, :]    # adj^T (sin(x1)*x2)
    x2ag = p1[16:20, :]   # DT * AG @ x2
    kxi = p1[20:24, :]    # K @ xi

    # interactions.sum(axis=0) via cos(a-b) = cos a cos b + sin a sin b:
    #   sum_i adj[i,j] * cos(x1_j - x1_i) * (x2_j - x2_i)
    inter = c * (x2 * ca - cxa) + s * (x2 * sa - sxa)

    # --- MXU pass 2: dh-dependent terms; DT, 5/4, K^T, AG^T, F pre-folded.
    m = jnp.tanh(kxi + b)                                            # (4, TB)
    p2 = jnp.dot(w2, m, preferred_element_type=jnp.float32)          # (8, TB)
    u_scaled = p2[0:4, :]      # = DT * 5/4 * u
    fdh_scaled = p2[4:8, :]    # = DT * F @ dH/dxi

    # Fused Euler update out = x + DT*[x2; dxdt; dxi_dt] as a single
    # lane-dense store (no lane-axis concatenates anywhere).
    out_ref[...] = jnp.concatenate(
        [x1 + DT * x2,
         x2 + u_scaled * inter,
         xi + fdh_scaled + x2ag], axis=0)


def _euler_step_cols(params, x_cols, *, block_b):
    """x_cols: (12, B) f32 with B a multiple of block_b."""
    b_total = x_cols.shape[1]
    grid = (b_total // block_b,)
    return pl.pallas_call(
        _kuramoto_euler_kernel,
        out_shape=jax.ShapeDtypeStruct((12, b_total), jnp.float32),
        grid_spec=pltpu.PrefetchScalarGridSpec(
            num_scalar_prefetch=0,
            grid=grid,
            in_specs=[
                pl.BlockSpec((12, block_b), lambda i: (0, i)),
                # constant index_map -> the 4 KiB param slab stays VMEM-resident
                pl.BlockSpec((40, 24), lambda i: (0, 0)),
            ],
            out_specs=pl.BlockSpec((12, block_b), lambda i: (0, i)),
        ),
        # Euler update writes in place over the state buffer.
        input_output_aliases={0: 0},
        compiler_params=pltpu.CompilerParams(
            # batch axis is embarrassingly parallel (uses both v7x TensorCores)
            dimension_semantics=("parallel",),
        ),
    )(x_cols, params)


def _forward_single(params, x, *, block_b):
    # x: (12, 1).  Broadcast across the lane axis so every load/store in the
    # kernel is lane-dense instead of a masked 1-lane access.
    x_cols = jnp.broadcast_to(x.astype(jnp.float32), (12, block_b))
    out = _euler_step_cols(params, x_cols, block_b=block_b)
    return out[:, 0:1]


def _forward_batched(params, xs, *, block_b):
    # xs: (12, B) -> pad B up to a multiple of block_b, run the grid, slice.
    b = xs.shape[1]
    b_pad = ((b + block_b - 1) // block_b) * block_b
    x_cols = jnp.pad(xs.astype(jnp.float32), ((0, 0), (0, b_pad - b)))
    out = _euler_step_cols(params, x_cols, block_b=block_b)
    return out[:, :b]


class ODEBlockPallas:
    """Pallas equivalent of ODEBlock(kuramoto_angular_closed_loop(...))."""

    def __init__(self, key, block_b=512):
        # kernel fuses exactly one Euler step; a longer time grid would
        # silently under-integrate.
        assert len(INTEGRATION_TIME) == 2

        k1, k2, k3 = jax.random.split(key, 3)
        self.adj = jnp.array([[0, 1, 0, 1],
                              [1, 0, 1, 0],
                              [0, 1, 0, 1],
                              [1, 0, 1, 0]], dtype=jnp.float32)
        # nn.Parameter(torch.rand(...)) -> uniform [0, 1)
        self.K = jax.random.uniform(k1, (4, 4), jnp.float32)
        self.b = jax.random.uniform(k2, (4, 1), jnp.float32)
        self.G = jax.random.uniform(k3, (4, 4), jnp.float32)
        self.J = jnp.array([[0, -1, 0, 0],
                            [1, 0, 0, 0],
                            [0, 0, 0, -1],
                            [0, 0, 1, 0]], dtype=jnp.float32)

        # ---- parameter-only precompute (float64 numpy, built once) ----
        adj = np.asarray(self.adj, np.float64)
        K = np.asarray(self.K, np.float64)
        b = np.asarray(self.b, np.float64)
        G = np.asarray(self.G, np.float64)
        J = np.asarray(self.J, np.float64)
        # gamma = 0.1 * max real eigenvalue of G G^T (symmetric PSD, so
        # eigvalsh == torch.linalg.eigvals + max(real)).
        # TODO(synk): general eigendecomposition has no Pallas equivalent; it
        # is parameter-only, so it lives in (numpy) glue.
        gamma = 0.1 * np.max(np.linalg.eigvalsh(G @ G.T))
        F = J - gamma * np.eye(4)
        AG = adj * G
        self.F = jnp.asarray(F, jnp.float32)
        self.AG = jnp.asarray(AG, jnp.float32)

        # Packed parameter slab (40, 24): every in-kernel view starts at lane
        # offset 0 and an 8-aligned sublane offset; padded entries stay zero.
        W1 = np.zeros((24, 24), np.float64)
        for blk in range(4):                       # adj^T for CA/SA/CXA/SXA
            lo = 4 * blk
            W1[lo:lo + 4, lo:lo + 4] = adj.T
        W1[16:20, 16:20] = DT * AG                 # DT * AG @ x2
        W1[20:24, 20:24] = K                       # K @ xi
        W2 = np.concatenate([-1.25 * DT * (AG.T @ K.T),   # DT*5/4*u   from m
                             DT * (F @ K.T)], axis=0)     # DT*F@dh    from m
        params = np.zeros((40, 24), np.float64)
        params[0:24, 0:24] = W1
        params[24:32, 0:4] = W2
        params[32:36, 0:1] = b
        self.params = jnp.asarray(params, jnp.float32)

        # jit the whole host path so each forward is ONE executable instead
        # of several eager dispatches (biggest wall-clock lever per review).
        self._forward1 = jax.jit(functools.partial(_forward_single,
                                                   block_b=128))
        self._forwardN = jax.jit(functools.partial(_forward_batched,
                                                   block_b=block_b))

    def __call__(self, x):
        """ODEBlock.forward semantics: x (12, 1) -> (12, 1)."""
        return self._forward1(self.params, x)

    def batched(self, xs):
        """Vectorized forward: xs (12, B) -> (12, B), batch on the lane axis."""
        return self._forwardN(self.params, xs)

    # pure-JAX reference mirroring the PyTorch module, for validation
    def reference(self, x):
        x = x.astype(jnp.float32)
        x1, x2, xi = x[0:4, :], x[4:8, :], x[8:12, :]
        a1 = x1.reshape(4)
        a2 = x2.reshape(4)
        g_ij = jnp.cos(a1[None, :] - a1[:, None])   # [i, j] = cos(x1[j]-x1[i])
        x_ij = a2[None, :] - a2[:, None]            # [i, j] = x2[j]-x2[i]
        interactions = self.adj * g_ij * x_ij
        dh = self.K.T @ jnp.tanh(self.K @ xi + self.b)
        u = -(self.AG.T @ dh)
        dxdt = (5.0 / 4.0) * u * interactions.sum(axis=0).reshape(4, 1)
        dxi_dt = self.F @ dh + self.AG @ x2
        f = jnp.concatenate([x2, dxdt, dxi_dt], axis=0)
        return x + DT * f


if __name__ == "__main__":
    key = jax.random.PRNGKey(0)
    k_params, k_x, k_batch = jax.random.split(key, 3)
    block = ODEBlockPallas(k_params, block_b=512)

    # vec_angles = torch.randn(12, 1) * 0.2   (ODEBlock.forward spec path)
    x = jax.random.normal(k_x, (12, 1), jnp.float32) * 0.2
    out = jax.block_until_ready(block(x))
    ref = block.reference(x)
    assert out.shape == (12, 1)
    assert jnp.allclose(out, ref, rtol=1e-3, atol=1e-3), (out, ref)

    # Batched lane-major path: (12, B) states, 1-D grid over 512-wide tiles.
    xs = jax.random.normal(k_batch, (12, 1000), jnp.float32) * 0.2
    outs = jax.block_until_ready(block.batched(xs))
    refs = jax.vmap(lambda col: block.reference(col[:, None])[:, 0],
                    in_axes=1, out_axes=1)(xs)
    assert outs.shape == (12, 1000)
    assert jnp.allclose(outs, refs, rtol=1e-3, atol=1e-3)

    print("KERNEL_OK")
</pallas_src>

<mosaic_0001>
module attributes {stable_mosaic.version = 11 : i64} {
  func.func @_kuramoto_euler_kernel(%arg0: i32, %arg1: memref<12x128xf32, #tpu.memory_space<vmem>>, %arg2: memref<40x24xf32, #tpu.memory_space<vmem>>, %arg3: memref<12x128xf32, #tpu.memory_space<vmem>>) attributes {dimension_semantics = [#tpu.dimension_semantics<parallel>], iteration_bounds = array<i64: 1>, scalar_prefetch = 0 : i64, scratch_operands = 0 : i64, tpu.core_type = #tpu.core_type<tc>, window_params = [{transform_indices = @transform_0, window_bounds = array<i64: 12, 128>}, {pipeline_mode = #tpu.pipeline_mode<synchronous>, transform_indices = @transform_1, window_bounds = array<i64: 40, 24>}, {transform_indices = @transform_2, window_bounds = array<i64: 12, 128>}]} {
    %c0 = arith.constant 0 : index
    %c0_0 = arith.constant 0 : index
    %0 = vector.load %arg1[%c0, %c0_0] : memref<12x128xf32, #tpu.memory_space<vmem>>, vector<12x128xf32>
    %1 = vector.extract_strided_slice %0 {offsets = [0, 0], sizes = [4, 128], strides = [1, 1]} : vector<12x128xf32> to vector<4x128xf32>
    %2 = vector.extract_strided_slice %0 {offsets = [4, 0], sizes = [4, 128], strides = [1, 1]} : vector<12x128xf32> to vector<4x128xf32>
    %3 = vector.extract_strided_slice %0 {offsets = [8, 0], sizes = [4, 128], strides = [1, 1]} : vector<12x128xf32> to vector<4x128xf32>
    %4 = math.cos %1 : vector<4x128xf32>
    %5 = math.sin %1 : vector<4x128xf32>
    %c0_1 = arith.constant 0 : index
    %c0_2 = arith.constant 0 : index
    %6 = vector.load %arg2[%c0_1, %c0_2] : memref<40x24xf32, #tpu.memory_space<vmem>>, vector<24x24xf32>
    %c24 = arith.constant 24 : index
    %c0_3 = arith.constant 0 : index
    %7 = vector.load %arg2[%c24, %c0_3] : memref<40x24xf32, #tpu.memory_space<vmem>>, vector<8x4xf32>
    %c32 = arith.constant 32 : index
    %c0_4 = arith.constant 0 : index
    %8 = vector.load %arg2[%c32, %c0_4] : memref<40x24xf32, #tpu.memory_space<vmem>>, vector<4x1xf32>
    %9 = arith.mulf %4, %2 : vector<4x128xf32>
    %10 = arith.mulf %5, %2 : vector<4x128xf32>
    %11 = tpu.concatenate %4, %5, %9, %10, %2, %3 in 0 : vector<4x128xf32>, vector<4x128xf32>, vector<4x128xf32>, vector<4x128xf32>, vector<4x128xf32>, vector<4x128xf32> -> vector<24x128xf32>
    %cst = arith.constant dense<0.000000e+00> : vector<24x128xf32>
    %12 = tpu.matmul %6, %11, %cst {dimension_numbers = #tpu.dot_dimension_numbers<[1], [0], [0], [1], [0, 0, 1, 1], [], []>} : vector<24x24xf32>, vector<24x128xf32>, vector<24x128xf32> -> vector<24x128xf32>
    %13 = vector.extract_strided_slice %12 {offsets = [0, 0], sizes = [4, 128], strides = [1, 1]} : vector<24x128xf32> to vector<4x128xf32>
    %14 = vector.extract_strided_slice %12 {offsets = [4, 0], sizes = [4, 128], strides = [1, 1]} : vector<24x128xf32> to vector<4x128xf32>
    %15 = vector.extract_strided_slice %12 {offsets = [8, 0], sizes = [4, 128], strides = [1, 1]} : vector<24x128xf32> to vector<4x128xf32>
    %16 = vector.extract_strided_slice %12 {offsets = [12, 0], sizes = [4, 128], strides = [1, 1]} : vector<24x128xf32> to vector<4x128xf32>
    %17 = vector.extract_strided_slice %12 {offsets = [16, 0], sizes = [4, 128], strides = [1, 1]} : vector<24x128xf32> to vector<4x128xf32>
    %18 = vector.extract_strided_slice %12 {offsets = [20, 0], sizes = [4, 128], strides = [1, 1]} : vector<24x128xf32> to vector<4x128xf32>
    %19 = arith.mulf %2, %13 : vector<4x128xf32>
    %20 = arith.subf %19, %15 : vector<4x128xf32>
    %21 = arith.mulf %4, %20 : vector<4x128xf32>
    %22 = arith.mulf %2, %14 : vector<4x128xf32>
    %23 = arith.subf %22, %16 : vector<4x128xf32>
    %24 = arith.mulf %5, %23 : vector<4x128xf32>
    %25 = arith.addf %21, %24 : vector<4x128xf32>
    %26 = vector.broadcast %8 : vector<4x1xf32> to vector<4x128xf32>
    %27 = arith.addf %18, %26 : vector<4x128xf32>
    %28 = math.tanh %27 : vector<4x128xf32>
    %cst_5 = arith.constant dense<0.000000e+00> : vector<8x128xf32>
    %29 = tpu.matmul %7, %28, %cst_5 {dimension_numbers = #tpu.dot_dimension_numbers<[1], [0], [0], [1], [0, 0, 1, 1], [], []>} : vector<8x4xf32>, vector<4x128xf32>, vector<8x128xf32> -> vector<8x128xf32>
    %30 = vector.extract_strided_slice %29 {offsets = [0, 0], sizes = [4, 128], strides = [1, 1]} : vector<8x128xf32> to vector<4x128xf32>
    %31 = vector.extract_strided_slice %29 {offsets = [4, 0], sizes = [4, 128], strides = [1, 1]} : vector<8x128xf32> to vector<4x128xf32>
    %cst_6 = arith.constant 3.000000e+00 : f32
    %32 = vector.broadcast %cst_6 : f32 to vector<4x128xf32>
    %33 = arith.mulf %32, %2 : vector<4x128xf32>
    %34 = arith.addf %1, %33 : vector<4x128xf32>
    %35 = arith.mulf %30, %25 : vector<4x128xf32>
    %36 = arith.addf %2, %35 : vector<4x128xf32>
    %37 = arith.addf %3, %31 : vector<4x128xf32>
    %38 = arith.addf %37, %17 : vector<4x128xf32>
    %39 = tpu.concatenate %34, %36, %38 in 0 : vector<4x128xf32>, vector<4x128xf32>, vector<4x128xf32> -> vector<12x128xf32>
    %c0_7 = arith.constant 0 : index
    %c0_8 = arith.constant 0 : index
    %40 = vector.load %arg3[%c0_7, %c0_8] : memref<12x128xf32, #tpu.memory_space<vmem>>, vector<12x128xf32>
    tpu.vector_store %arg3[%c0_7, %c0_8], %39 {strides = array<i32>} : memref<12x128xf32, #tpu.memory_space<vmem>>, vector<12x128xf32>,
    return
  }
  func.func @transform_0(%arg0: i32) -> (i32, i32) {
    %c0_i32 = arith.constant 0 : i32
    %c0_i32_0 = arith.constant 0 : i32
    return %c0_i32, %arg0 : i32, i32
  }
  func.func @transform_1(%arg0: i32) -> (i32, i32) {
    %c0_i32 = arith.constant 0 : i32
    %c0_i32_0 = arith.constant 0 : i32
    %c0_i32_1 = arith.constant 0 : i32
    return %c0_i32, %c0_i32_0 : i32, i32
  }
  func.func @transform_2(%arg0: i32) -> (i32, i32) {
    %c0_i32 = arith.constant 0 : i32
    %c0_i32_0 = arith.constant 0 : i32
    return %c0_i32, %arg0 : i32, i32
  }
}

</mosaic_0001>

<llo_original>
// kernel: _forward_single.1
$region0: #{_forward_single.1}
  #allocation0 [shape = 'u32[]', space=smem, size = 0x4, offset = 0x4, fixed_abs, tag = 'smem constant byte address 0x4 - core index']
  #allocation1 [shape = 'u32[144,128]{1,0:T(1,128)}', space=vmem, size = 0x12000, scoped, tag = 'internal scratch']
  %s0 = inlined_call_operand.vmem [shape: f32[12,128], index: 0, kind: input, shape index: {}, may-alias: {0,2}]
  %s1 = inlined_call_operand.vmem [shape: f32[40,24], index: 1, kind: input, shape index: {}]
  %s2 = inlined_call_operand.vmem [shape: f32[12,128], index: 2, kind: output, shape index: {}, may-alias: {0,2}]
  %s3 = sld [smem:[#allocation0]]
  $region18: #{_forward_single.1} parent=0
    _
  %s5 = ssub.s32 1, %s3
  %s6 = scalar_select 0, %s5, %s3
  // Predicated region
  $region2: #{_forward_single.1} parent=0 // pred_check
    _
  $region3: #{_forward_single.1} parent=0 // pred_check_branch
    %8 = sbr.rel (0) target = $region5
  $region4: #{_forward_single.1} parent=0 // pred_region
    _
  $region5: #{_forward_single.1} parent=0 // pred_fallthru
    _
  // Predicated region
  $region6: #{_forward_single.1} parent=0 // pred_check
    _
  $region7: #{_forward_single.1} parent=0 // pred_check_branch
    %10 = sbr.rel (0) target = $region9
  $region8: #{_forward_single.1} parent=0 // pred_region
    _
  $region9: #{_forward_single.1} parent=0 // pred_fallthru
    _
  %v11 = vld [vmem:[%s0] sm:$0xff]
  %v12 = vld [vmem:[%s0 + $0x8] sm:$0xf]
  %v13 = vand.u32 2147483647, %v11
  %vm14 = vcmp.le.f32.partialorder %v13, 0.7853982
  %vm15 = vcmp.lt.s32.totalorder %v11, 0
  %v16 = vand.u32 %v11, 2139095040
  %v17 = vshrl.u32 %v16, 23
  %v18 = vsub.s32 %v17, 127
  %v19 = vand.u32 2147483647, %v11
  %v20 = vand.u32 %v19, 8388607
  %v21 = vor.u32 %v20, 8388608
  %v22 = vsub.s32 0, %v21
  %v23 = vadd.s32 %v18, 1
  %vm24 = vcmp.gt.s32.totalorder %v23, 0
  %v25 = vsel %vm24, %v23, 0
  %v26 = vshrl.u32 %v25, 5
  %v27 = vand.u32 %v25, 31
  %v28 = vsub.s32 32, %v27
  %v29 = vshrl.u32 683565275, %v28
  %v30 = vshll.u32 683565275, %v27
  %v31 = vshrl.u32 2475754826, %v28
  %v32 = vor.u32 %v30, %v31
  %v33 = vshll.u32 2475754826, %v27
  %v34 = vshrl.u32 2131351028, %v28
  %v35 = vor.u32 %v33, %v34
  %v36 = vshll.u32 2131351028, %v27
  %v37 = vshrl.u32 2102212464, %v28
  %v38 = vor.u32 %v36, %v37
  %v39 = vshll.u32 2102212464, %v27
  %v40 = vshrl.u32 920167782, %v28
  %v41 = vor.u32 %v39, %v40
  %v42 = vshll.u32 920167782, %v27
  %v43 = vshrl.u32 1326507024, %v28
  %v44 = vor.u32 %v42, %v43
  %vm45 = vcmp.lt.s32.totalorder %v26, 1
  %vm46 = vcmp.lt.s32.totalorder %v26, 2
  %vm47 = vcmp.lt.s32.totalorder %v26, 3
  %vm48 = vcmp.lt.s32.totalorder %v26, 4
  %v49 = vsel %vm45, %v29, %v32
  %v50 = vsel %vm48, %v38, 2102212464
  %v51 = vsel %vm47, %v35, %v50
  %v52 = vsel %vm46, %v49, %v51
  %v53 = vsel %vm45, %v32, %v35
  %v54 = vsel %vm48, %v41, 920167782
  %v55 = vsel %vm47, %v38, %v54
  %v56 = vsel %vm46, %v53, %v55
  %v57 = vsel %vm45, %v35, %v38
  %v58 = vsel %vm48, %v44, 1326507024
  %v59 = vsel %vm47, %v41, %v58
  %v60 = vsel %vm46, %v57, %v59
  %v61 = vshll.u32 %v21, 8
  %v62 = vmul.u32.u64.compose %v61, %v60
  %v63 = vextract.low.u32 %v62
  %v64 = vextract.high.u32 %v62
  %v65 = vmul.u32.u64.compose %v61, %v56
  %v66 = vextract.low.u32 %v65
  %v67 = vextract.high.u32 %v65
  %v68 = vmul.u32 %v61, %v52
  %v69 = vadd.s32 %v64, %v66
  %vm70 = vc.u32 %v64, %v66
  %v71 = vadd.s32 %v67, 1
  %v72 = vsel %vm70, %v71, %v67
  %v73 = vadd.s32 %v68, %v72
  %v74 = vadd.s32 %v73, 536870912
  %v75 = vshrl.u32 %v74, 30
  %v76 = vshll.u32 %v75, 30
  %v77 = vsub.s32 %v73, %v76
  %vm78 = vcmp.lt.s32.totalorder %v77, 0
  %v79 = vsub.s32 0, %v77
  %v80 = vsel %vm78, %v79, %v77
  %v81 = vclz %v80
  %v82 = vsub.s32 %v81, 2
  %vm83 = vcmp.gt.s32.totalorder 0, %v82
  %v84 = vsel %vm83, 0, %v82
  %v85 = vsub.s32 32, %v84
  %v86 = vshll.u32 %v77, %v84
  %v87 = vshrl.u32 %v69, %v85
  %v88 = vor.u32 %v86, %v87
  %v89 = vsub.s32 4294967266, %v84
  %v90 = vadd.s32 %v89, 127
  %v91 = vshll.u32 %v90, 23
  %v92 = vor.u32 4788187, %v91
  %v93 = vand.u32 2147483647, %v92
  %v95 = vcvt.s32.f32 %v88
  %v96 = vmul.f32 %v95, %v93
  %v97 = vxor.u32 %v96, 2147483648
  %v98 = vsel %vm15, %v97, %v96
  %v99 = vsub.s32 4, %v75
  %v100 = vsel %vm15, %v99, %v75
  %v101 = vsel %vm14, %v11, %v98
  %v102 = vsel %vm14, 0, %v100
  %v103 = vcosq.f32.pop %v101
  %v104 = vsinq.f32.pop %v101
  %vm105 = vweird.f32 %v11
  %v106 = vand.u32 %v102, 3
  %vm107 = vcmp.lt.s32.totalorder %v106, 2
  %vm108 = vcmp.eq.s32.totalorder %v106, 0
  %v109 = vxor.u32 %v104, 2147483648
  %v110 = vsel %vm108, %v103, %v109
  %vm111 = vcmp.eq.s32.totalorder %v106, 2
  %v112 = vxor.u32 %v103, 2147483648
  %v113 = vsel %vm111, %v112, %v104
  %v114 = vsel %vm107, %v110, %v113
  %v115 = vsel %vm105, nan, %v114
  %v116 = vand.u32 2147483647, %v11
  %vm117 = vcmp.le.f32.partialorder %v116, 0.7853982
  %vm118 = vcmp.lt.s32.totalorder %v11, 0
  %v119 = vand.u32 %v11, 2139095040
  %v120 = vshrl.u32 %v119, 23
  %v121 = vsub.s32 %v120, 127
  %v122 = vand.u32 2147483647, %v11
  %v123 = vand.u32 %v122, 8388607
  %v124 = vor.u32 %v123, 8388608
  %v125 = vsub.s32 0, %v124
  %v126 = vadd.s32 %v121, 1
  %vm127 = vcmp.gt.s32.totalorder %v126, 0
  %v128 = vsel %vm127, %v126, 0
  %v129 = vshrl.u32 %v128, 5
  %v130 = vand.u32 %v128, 31
  %v131 = vsub.s32 32, %v130
  %v132 = vshrl.u32 683565275, %v131
  %v133 = vshll.u32 683565275, %v130
  %v134 = vshrl.u32 2475754826, %v131
  %v135 = vor.u32 %v133, %v134
  %v136 = vshll.u32 2475754826, %v130
  %v137 = vshrl.u32 2131351028, %v131
  %v138 = vor.u32 %v136, %v137
  %v139 = vshll.u32 2131351028, %v130
  %v140 = vshrl.u32 2102212464, %v131
  %v141 = vor.u32 %v139, %v140
  %v142 = vshll.u32 2102212464, %v130
  %v143 = vshrl.u32 920167782, %v131
  %v144 = vor.u32 %v142, %v143
  %v145 = vshll.u32 920167782, %v130
  %v146 = vshrl.u32 1326507024, %v131
  %v147 = vor.u32 %v145, %v146
  %vm148 = vcmp.lt.s32.totalorder %v129, 1
  %vm149 = vcmp.lt.s32.totalorder %v129, 2
  %vm150 = vcmp.lt.s32.totalorder %v129, 3
  %vm151 = vcmp.lt.s32.totalorder %v129, 4
  %v152 = vsel %vm148, %v132, %v135
  %v153 = vsel %vm151, %v141, 2102212464
  %v154 = vsel %vm150, %v138, %v153
  %v155 = vsel %vm149, %v152, %v154
  %v156 = vsel %vm148, %v135, %v138
  %v157 = vsel %vm151, %v144, 920167782
  %v158 = vsel %vm150, %v141, %v157
  %v159 = vsel %vm149, %v156, %v158
  %v160 = vsel %vm148, %v138, %v141
  %v161 = vsel %vm151, %v147, 1326507024
  %v162 = vsel %vm150, %v144, %v161
  %v163 = vsel %vm149, %v160, %v162
  %v164 = vshll.u32 %v124, 8
  %v165 = vmul.u32.u64.compose %v164, %v163
  %v166 = vextract.low.u32 %v165
  %v167 = vextract.high.u32 %v165
  %v168 = vmul.u32.u64.compose %v164, %v159
  %v169 = vextract.low.u32 %v168
  %v170 = vextract.high.u32 %v168
  %v171 = vmul.u32 %v164, %v155
  %v172 = vadd.s32 %v167, %v169
  %vm173 = vc.u32 %v167, %v169
  %v174 = vadd.s32 %v170, 1
  %v175 = vsel %vm173, %v174, %v170
  %v176 = vadd.s32 %v171, %v175
  %v177 = vadd.s32 %v176, 536870912
  %v178 = vshrl.u32 %v177, 30
  %v179 = vshll.u32 %v178, 30
  %v180 = vsub.s32 %v176, %v179
  %vm181 = vcmp.lt.s32.totalorder %v180, 0
  %v182 = vsub.s32 0, %v180
  %v183 = vsel %vm181, %v182, %v180
  %v184 = vclz %v183
  %v185 = vsub.s32 %v184, 2
  %vm186 = vcmp.gt.s32.totalorder 0, %v185
  %v187 = vsel %vm186, 0, %v185
  %v188 = vsub.s32 32, %v187
  %v189 = vshll.u32 %v180, %v187
  %v190 = vshrl.u32 %v172, %v188
  %v191 = vor.u32 %v189, %v190
  %v192 = vsub.s32 4294967266, %v187
  %v193 = vadd.s32 %v192, 127
  %v194 = vshll.u32 %v193, 23
  %v195 = vor.u32 4788187, %v194
  %v196 = vand.u32 2147483647, %v195
  %v198 = vcvt.s32.f32 %v191
  %v199 = vmul.f32 %v198, %v196
  %v200 = vxor.u32 %v199, 2147483648
  %v201 = vsel %vm118, %v200, %v199
  %v202 = vsub.s32 4, %v178
  %v203 = vsel %vm118, %v202, %v178
  %v204 = vsel %vm117, %v11, %v201
  %v205 = vsel %vm117, 0, %v203
  %v206 = vcosq.f32.pop %v204
  %v207 = vsinq.f32.pop %v204
  %vm208 = vweird.f32 %v11
  %v209 = vadd.s32 %v205, 3
  %v210 = vand.u32 %v209, 3
  %vm211 = vcmp.lt.s32.totalorder %v210, 2
  %vm212 = vcmp.eq.s32.totalorder %v210, 0
  %v213 = vxor.u32 %v207, 2147483648
  %v214 = vsel %vm212, %v206, %v213
  %vm215 = vcmp.eq.s32.totalorder %v210, 2
  %v216 = vxor.u32 %v206, 2147483648
  %v217 = vsel %vm215, %v216, %v207
  %v218 = vsel %vm211, %v214, %v217
  %v219 = vsel %vm208, nan, %v218
  %v220 = vld [vmem:[%s1] sm:$0xff]
  %v221 = vld [vmem:[%s1 + $0x8] sm:$0xff]
  %v222 = vld [vmem:[%s1 + $0x10] sm:$0xff]
  %v223 = vld [vmem:[%s1 + $0x18] sm:$0xff]
  %v224 = vld [vmem:[%s1 + $0x20] sm:$0xf]
  %v226 = vrot.slane %v11, 4
  %v228 = vmul.f32 %v115, %v226
  %v229 = vmul.f32 %v219, %v226
  %v231 = vrot.slane %v219, 4
  %v234 = vrot.slane %v229, 4
  %v237 = vrot.slane %v12, 4
  %vm239 = vcmask 1043456
  %v240 = vsel %vm239, %v115, %v231
  %v241 = vsel %vm239, %v228, %v234
  %v242 = vsel %vm239, %v226, %v237
  %vm243 = vcmask 195584
  %v245 = vsel %vm243, %v220, 0
  %v248 = vsel %vm243, %v221, 0
  %v251 = vsel %vm243, %v222, 0
  %253 = vmatprep.subr.mxu0 0.0
  %254 = vmatpush1.msra.mxu0 %v240
  %255 = vmatprep.subr.mxu0 0.0
  %256 = vmatpush1.msra.mxu0 %v241
  %257 = vmatprep.subr.mxu0 0.0
  %258 = vmatpush1.msra.mxu0 %v242
  %259 = vmatprep.subr.mxu0 0.0
  %260 = vmatpush1.msra.mxu0 0.0
  %261 = vmatprep.subr.mxu0 0.0
  %262 = vmatpush1.msra.mxu0 0.0
  %263 = vmatprep.subr.mxu0 0.0
  %264 = vmatpush1.msra.mxu0 0.0
  %265 = vmatprep.subr.mxu0 0.0
  %266 = vmatpush1.msra.mxu0 0.0
  %267 = vmatprep.subr.mxu0 0.0
  %268 = vmatpush1.msra.mxu0 0.0
  %269 = vmatprep.subr.mxu0 0.0
  %270 = vmatpush1.msra.mxu0 0.0
  %271 = vmatprep.subr.mxu0 0.0
  %272 = vmatpush1.msra.mxu0 0.0
  %273 = vmatprep.subr.mxu0 0.0
  %274 = vmatpush1.msra.mxu0 0.0
  %275 = vmatprep.subr.mxu0 0.0
  %276 = vmatpush1.msra.mxu0 0.0
  %277 = vmatprep.subr.mxu0 0.0
  %278 = vmatpush1.msra.mxu0 0.0
  %279 = vmatprep.subr.mxu0 0.0
  %280 = vmatpush1.msra.mxu0 0.0
  %281 = vmatprep.subr.mxu0 0.0
  %282 = vmatpush1.msra.mxu0 0.0
  %283 = vmatprep.subr.mxu0 0.0
  %284 = vmatpush1.msra.mxu0 0.0
  %285 = vmatprep.subr.mxu0 0.0
  %286 = vmatpush1.msra.mxu0 0.0
  %287 = vmatprep.subr.mxu0 0.0
  %288 = vmatpush1.msra.mxu0 0.0
  %289 = vmatprep.subr.mxu0 0.0
  %290 = vmatpush1.msra.mxu0 0.0
  %291 = vmatprep.subr.mxu0 0.0
  %292 = vmatpush1.msra.mxu0 0.0
  %293 = vmatprep.subr.mxu0 0.0
  %294 = vmatpush1.msra.mxu0 0.0
  %295 = vmatprep.subr.mxu0 0.0
  %296 = vmatpush1.msra.mxu0 0.0
  %297 = vmatprep.subr.mxu0 0.0
  %298 = vmatpush1.msra.mxu0 0.0
  %299 = vmatprep.subr.mxu0 0.0
  %300 = vmatpush1.msra.mxu0 0.0
  %301 = vmatprep.subr.mxu0 0.0
  %302 = vmatpush1.msra.mxu0 0.0
  %303 = vmatprep.subr.mxu0 0.0
  %304 = vmatpush1.msra.mxu0 0.0
  %305 = vmatprep.subr.mxu0 0.0
  %306 = vmatpush1.msra.mxu0 0.0
  %307 = vmatprep.subr.mxu0 0.0
  %308 = vmatpush1.msra.mxu0 0.0
  %309 = vmatprep.subr.mxu0 0.0
  %310 = vmatpush1.msra.mxu0 0.0
  %311 = vmatprep.subr.mxu0 0.0
  %312 = vmatpush1.msra.mxu0 0.0
  %313 = vmatprep.subr.mxu0 0.0
  %314 = vmatpush1.msra.mxu0 0.0
  %315 = vmatprep.subr.mxu0 0.0
  %316 = vmatpush1.msra.mxu0 0.0
  %317 = vmatprep.mubr.f32.mxu0 0.0
  %318 = vmatmul.mubr.f32.gmra.mrb[0].mxu0 %v245
  %v319 = vpop.f32.mrb[0].mxu0
  %v320 = vadd.f32 0.0, %v319
  %v321 = vpop.f32.mrb[0].mxu0
  %322 = vmatprep.mubr.f32.mxu0 0.0
  %323 = vmatmul.mubr.f32.gmra.mrb[0].mxu0 %v248
  %v324 = vpop.f32.mrb[0].mxu0
  %v325 = vadd.f32 0.0, %v324
  %v326 = vpop.f32.mrb[0].mxu0
  %327 = vmatprep.mubr.f32.mxu0 0.0
  %328 = vmatmul.mubr.f32.gmra.mrb[0].mxu0 %v251
  %v329 = vpop.f32.mrb[0].mxu0
  %v330 = vadd.f32 0.0, %v329
  %v331 = vpop.f32.mrb[0].mxu0
  %332 = vdwg.mxu0
  %v334 = vrot.slane %v320, 4
  %v336 = vmul.f32 %v11, %v334
  %v338 = vrot.slane %v325, 4
  %v340 = vsub.f32 %v336, %v338
  %v342 = vrot.slane %v340, 4
  %v344 = vmul.f32 %v115, %v342
  %v345 = vmul.f32 %v11, %v320
  %v346 = vsub.f32 %v345, %v325
  %v348 = vrot.slane %v346, 4
  %v350 = vmul.f32 %v219, %v348
  %v351 = vadd.f32 %v344, %v350
  %353 = vset.pattern.permute.xlu0 0
  %354 = vperm.xlu0 %353, %v224
  %v355 = vpop.permute.xlu0 %354
  %v356 = vrot.slane %v355, 4
  %v358 = vadd.f32 %v330, %v356
  %v359 = vtanh.pop %v358
  %v361 = vrot.slane %v359, 4
  %vm362 = vcmask 31744
  %v364 = vsel %vm362, %v223, 0
  %v366 = vsel %vm239, %v361, 0
  %368 = vmatprep.subr.mxu0 0.0
  %369 = vmatpush1.msra.mxu0 %v366
  %370 = vmatprep.subr.mxu0 0.0
  %371 = vmatpush1.msra.mxu0 0.0
  %372 = vmatprep.subr.mxu0 0.0
  %373 = vmatpush1.msra.mxu0 0.0
  %374 = vmatprep.subr.mxu0 0.0
  %375 = vmatpush1.msra.mxu0 0.0
  %376 = vmatprep.subr.mxu0 0.0
  %377 = vmatpush1.msra.mxu0 0.0
  %378 = vmatprep.subr.mxu0 0.0
  %379 = vmatpush1.msra.mxu0 0.0
  %380 = vmatprep.subr.mxu0 0.0
  %381 = vmatpush1.msra.mxu0 0.0
  %382 = vmatprep.subr.mxu0 0.0
  %383 = vmatpush1.msra.mxu0 0.0
  %384 = vmatprep.subr.mxu0 0.0
  %385 = vmatpush1.msra.mxu0 0.0
  %386 = vmatprep.subr.mxu0 0.0
  %387 = vmatpush1.msra.mxu0 0.0
  %388 = vmatprep.subr.mxu0 0.0
  %389 = vmatpush1.msra.mxu0 0.0
  %390 = vmatprep.subr.mxu0 0.0
  %391 = vmatpush1.msra.mxu0 0.0
  %392 = vmatprep.subr.mxu0 0.0
  %393 = vmatpush1.msra.mxu0 0.0
  %394 = vmatprep.subr.mxu0 0.0
  %395 = vmatpush1.msra.mxu0 0.0
  %396 = vmatprep.subr.mxu0 0.0
  %397 = vmatpush1.msra.mxu0 0.0
  %398 = vmatprep.subr.mxu0 0.0
  %399 = vmatpush1.msra.mxu0 0.0
  %400 = vmatprep.subr.mxu0 0.0
  %401 = vmatpush1.msra.mxu0 0.0
  %402 = vmatprep.subr.mxu0 0.0
  %403 = vmatpush1.msra.mxu0 0.0
  %404 = vmatprep.subr.mxu0 0.0
  %405 = vmatpush1.msra.mxu0 0.0
  %406 = vmatprep.subr.mxu0 0.0
  %407 = vmatpush1.msra.mxu0 0.0
  %408 = vmatprep.subr.mxu0 0.0
  %409 = vmatpush1.msra.mxu0 0.0
  %410 = vmatprep.subr.mxu0 0.0
  %411 = vmatpush1.msra.mxu0 0.0
  %412 = vmatprep.subr.mxu0 0.0
  %413 = vmatpush1.msra.mxu0 0.0
  %414 = vmatprep.subr.mxu0 0.0
  %415 = vmatpush1.msra.mxu0 0.0
  %416 = vmatprep.subr.mxu0 0.0
  %417 = vmatpush1.msra.mxu0 0.0
  %418 = vmatprep.subr.mxu0 0.0
  %419 = vmatpush1.msra.mxu0 0.0
  %420 = vmatprep.subr.mxu0 0.0
  %421 = vmatpush1.msra.mxu0 0.0
  %422 = vmatprep.subr.mxu0 0.0
  %423 = vmatpush1.msra.mxu0 0.0
  %424 = vmatprep.subr.mxu0 0.0
  %425 = vmatpush1.msra.mxu0 0.0
  %426 = vmatprep.subr.mxu0 0.0
  %427 = vmatpush1.msra.mxu0 0.0
  %428 = vmatprep.subr.mxu0 0.0
  %429 = vmatpush1.msra.mxu0 0.0
  %430 = vmatprep.subr.mxu0 0.0
  %431 = vmatpush1.msra.mxu0 0.0
  %432 = vmatprep.mubr.f32.mxu0 0.0
  %433 = vmatmul.mubr.f32.gmra.mrb[0].mxu0 %v364
  %v434 = vpop.f32.mrb[0].mxu0
  %v435 = vadd.f32 0.0, %v434
  %v436 = vpop.f32.mrb[0].mxu0
  %437 = vdwg.mxu0
  %v438 = vmul.f32 %v11, 3.0
  %v440 = vrot.slane %v438, 4
  %v442 = vadd.f32 %v11, %v440
  %v443 = vmul.f32 %v435, %v351
  %v445 = vrot.slane %v443, 4
  %v447 = vadd.f32 %v11, %v445
  %v449 = vrot.slane %v435, 4
  %v451 = vadd.f32 %v12, %v449
  %v452 = vadd.f32 %v451, %v330
  %v453 = vsel %vm239, %v442, %v447
  %454 = vst [vmem:[%s2] sm:$0xff] %v453
  %455 = vst [vmem:[%s2 + $0x8] sm:$0xf] %v452
  // Predicated region
  $region10: #{_forward_single.1} parent=0 // pred_check
    _
  $region11: #{_forward_single.1} parent=0 // pred_check_branch
    %457 = sbr.rel (0) target = $region13
  $region12: #{_forward_single.1} parent=0 // pred_region
    _
  $region13: #{_forward_single.1} parent=0 // pred_fallthru
    _
  // Predicated region
  $region14: #{_forward_single.1} parent=0 // pred_check
    _
  $region15: #{_forward_single.1} parent=0 // pred_check_branch
    %459 = sbr.rel (0) target = $region17
  $region16: #{_forward_single.1} parent=0 // pred_region
    _
  $region17: #{_forward_single.1} parent=0 // pred_fallthru
    _

</llo_original>
